<compile_context>
chip_gen: v6e
topology: v6e:2x2x1
jax: 0.10.0
libtpu: 0.0.40
codegen_flags: <defaults>
</compile_context>

<pallas_src>
import jax
import jax.numpy as jnp
from jax.experimental import pallas as pl
from jax.experimental.pallas import tpu as pltpu

NDIM = 5                 # ndim from the module
NEG_SLOPE = 0.01         # nn.LeakyReLU default negative_slope

# flat parameter layout in SMEM: [w1 (NDIM), b1 (NDIM), w2 row-major (in,out)
# (NDIM*NDIM), b2 (NDIM)]
_W1_OFF = 0
_B1_OFF = NDIM
_W2_OFF = 2 * NDIM
_B2_OFF = 2 * NDIM + NDIM * NDIM
_NPARAMS = 2 * NDIM + NDIM * NDIM + NDIM


def _leaky_relu(x):
    return jnp.where(x > 0, x, NEG_SLOPE * x)


def basic_encoding_kernel(params_ref, x_ref, o_ref):
    # params_ref: SMEM f32[_NPARAMS]
    # x_ref:      VMEM (tile_rows, lanes)       -- each element is one sample
    # o_ref:      VMEM (NDIM, tile_rows, lanes) -- lane-dense per-feature slabs
    #
    # Hoist all 40 scalar reads once (JAX does not CSE broadcast_in_dim).
    w1 = [params_ref[_W1_OFF + k] for k in range(NDIM)]
    b1 = [params_ref[_B1_OFF + k] for k in range(NDIM)]
    w2 = [[params_ref[_W2_OFF + k * NDIM + j] for j in range(NDIM)]
          for k in range(NDIM)]
    b2 = [params_ref[_B2_OFF + j] for j in range(NDIM)]

    x = x_ref[...]

    # ---- Layer 1 + LeakyReLU: K=1, pure broadcast FMA on the VPU ----
    # LeakyReLU as max(t, a*t): valid for 0 < a < 1, one VALU op cheaper than where().
    h = []
    for k in range(NDIM):
        t = x * w1[k] + b1[k]
        h.append(jnp.maximum(t, NEG_SLOPE * t))

    # ---- Layer 2 + LeakyReLU: NDIM x NDIM unrolled scalar-weight FMAs ----
    # TODO(synk): if a v7x bundle dump shows vld/vst slot saturation from the
    # block-sized intermediates, restructure as an 8-row-strip fori_loop so h
    # and the accumulators stay vreg-resident.
    for j in range(NDIM):
        acc = h[0] * w2[0][j] + b2[j]
        for k in range(1, NDIM):
            acc = acc + h[k] * w2[k][j]
        yj = jnp.maximum(acc, NEG_SLOPE * acc)
        o_ref[j] = yj.astype(o_ref.dtype)   # full (tile_rows, lanes) lane-dense store


def _basic_encoding_raw(x, w1, b1, w2, b2, *, lanes, tile_rows, out_dtype):
    """Run the kernel; returns ((NDIM, rows, lanes) output, n_pad)."""
    n, in_dim = x.shape
    assert in_dim == 1
    assert w1.shape == (NDIM,) and b1.shape == (NDIM,)
    assert w2.shape == (NDIM, NDIM) and b2.shape == (NDIM,)
    assert lanes % 128 == 0 and tile_rows >= 8

    # All 40 parameters as one flat SMEM-resident vector.
    params = jnp.concatenate(
        [w1.reshape(-1), b1.reshape(-1), w2.reshape(-1), b2.reshape(-1)]
    ).astype(jnp.float32)

    itemsize = jnp.dtype(out_dtype).itemsize
    sub = max(8, 32 // itemsize)          # sublane granularity: 8 f32, 16 bf16

    # Lane-densify: (N,1) -> (rows, lanes). Pad the flat input only up to a
    # multiple of sub*lanes (one sublane group of rows), NOT a whole grid
    # block; the last row-block may be partial (Pallas masks the ragged tail).
    chunk = sub * lanes
    n_pad = pl.cdiv(n, chunk) * chunk
    xf = x.reshape(-1).astype(jnp.float32)
    if n_pad != n:
        xf = jnp.pad(xf, (0, n_pad - n))
    rows = n_pad // lanes

    # Effective row tile: multiple of `sub`, clamped to the array extent.
    tr = min(max(tile_rows, sub) // sub * sub, rows)
    grid = (pl.cdiv(rows, tr),)

    # VMEM budget: double-buffered in + out blocks, with headroom; stays under
    # v7x's 32 MiB scoped default / 64 MiB physical, above v5e's 16 MiB default.
    in_bytes = tr * lanes * 4
    out_bytes = NDIM * tr * lanes * itemsize
    vmem_limit = int(min(max(2 * (in_bytes + out_bytes) + (2 << 20), 16 << 20),
                         48 << 20))

    out = pl.pallas_call(
        basic_encoding_kernel,
        out_shape=jax.ShapeDtypeStruct((NDIM, rows, lanes), out_dtype),
        grid_spec=pltpu.PrefetchScalarGridSpec(
            num_scalar_prefetch=0,
            grid=grid,
            in_specs=[
                # all weights/biases as SMEM scalars (no padded VMEM tiles)
                pl.BlockSpec(memory_space=pltpu.MemorySpace.SMEM),
                # lane-dense input block
                pl.BlockSpec((tr, lanes), lambda i: (i, 0)),
            ],
            # lane-dense output block: last dim = lanes (multiple of 128)
            out_specs=pl.BlockSpec((NDIM, tr, lanes), lambda i: (0, i, 0)),
        ),
        compiler_params=pltpu.CompilerParams(
            dimension_semantics=("parallel",),
            vmem_limit_bytes=vmem_limit,
        ),
        cost_estimate=pl.CostEstimate(
            flops=80 * n_pad,
            transcendentals=0,
            bytes_accessed=(4 + NDIM * itemsize) * n_pad,
        ),
    )(params, xf.reshape(rows, lanes))
    return out, n_pad


def basic_encoding_columnar(x, w1, b1, w2, b2, *, lanes=1024, tile_rows=256,
                            out_dtype=jnp.float32):
    """Fast path: returns (NDIM, N) in the kernel's native columnar layout.

    Same values as PyTorch BasicEncoding.forward(x).T, but with no post-kernel
    transpose — preferred when the downstream consumer can take feature-major
    input (or is itself a Pallas kernel that can fuse this layout).
    """
    n = x.shape[0]
    out, n_pad = _basic_encoding_raw(x, w1, b1, w2, b2, lanes=lanes,
                                     tile_rows=tile_rows, out_dtype=out_dtype)
    out = out.reshape(NDIM, n_pad)        # free: contiguous merge of last two dims
    return out if n == n_pad else out[:, :n]


def basic_encoding(x, w1, b1, w2, b2, *, lanes=1024, tile_rows=256,
                   out_dtype=jnp.float32):
    """Compat path matching the PyTorch layout: (N, NDIM).

    Note: the transpose below re-reads/re-writes the whole output in XLA; for
    a memory-bound consumer prefer `basic_encoding_columnar`.
    """
    n = x.shape[0]
    out, n_pad = _basic_encoding_raw(x, w1, b1, w2, b2, lanes=lanes,
                                     tile_rows=tile_rows, out_dtype=out_dtype)
    out = jnp.transpose(out, (1, 2, 0)).reshape(n_pad, NDIM)
    return out[:n]


def init_params(key, ndim=NDIM):
    """Deterministic init mimicking nn.Linear's U(-1/sqrt(fan_in), 1/sqrt(fan_in))."""
    k1, k2, k3, k4 = jax.random.split(key, 4)
    bound1 = 1.0                              # fc1: in_features = 1
    bound2 = 1.0 / jnp.sqrt(float(ndim))      # fc2: in_features = ndim
    w1 = jax.random.uniform(k1, (ndim,), jnp.float32, -bound1, bound1)
    b1 = jax.random.uniform(k2, (ndim,), jnp.float32, -bound1, bound1)
    # stored transposed relative to PyTorch: (in, out)
    w2 = jax.random.uniform(k3, (ndim, ndim), jnp.float32, -bound2, bound2)
    b2 = jax.random.uniform(k4, (ndim,), jnp.float32, -bound2, bound2)
    return w1, b1, w2, b2


def reference(x, w1, b1, w2, b2):
    h = _leaky_relu(x @ w1.reshape(1, -1) + b1.reshape(1, -1))
    return _leaky_relu(h @ w2 + b2.reshape(1, -1))


if __name__ == "__main__":
    key = jax.random.PRNGKey(0)
    kx, kp = jax.random.split(key)
    w1, b1, w2, b2 = init_params(kp)

    # Small demo shapes: lanes=256, tile_rows=8 -> 2-step grid at N=4096.
    N = 4096
    x = jax.random.normal(kx, (N, 1), jnp.float32)
    ref = reference(x, w1, b1, w2, b2)

    # Fast path: columnar (NDIM, N) output, no post-kernel transpose.
    out_col = jax.block_until_ready(
        basic_encoding_columnar(x, w1, b1, w2, b2, lanes=256, tile_rows=8))
    assert out_col.shape == (NDIM, N)
    assert jnp.allclose(out_col.T, ref, atol=1e-5, rtol=1e-5), "columnar mismatch"

    # Compat path: (N, NDIM) exactly like the PyTorch module.
    out = jax.block_until_ready(
        basic_encoding(x, w1, b1, w2, b2, lanes=256, tile_rows=8))
    assert out.shape == (N, NDIM)
    assert jnp.allclose(out, ref, atol=1e-5, rtol=1e-5), "compat mismatch"

    # Ragged N: tail padded only to a multiple of 8*lanes; the last row-block
    # is partial (rows=24, tile=16 -> grid=2 with a half-valid second block).
    N2 = 5000
    x2 = jax.random.normal(kx, (N2, 1), jnp.float32)
    out2 = jax.block_until_ready(
        basic_encoding(x2, w1, b1, w2, b2, lanes=256, tile_rows=16))
    ref2 = reference(x2, w1, b1, w2, b2)
    assert out2.shape == (N2, NDIM)
    assert jnp.allclose(out2, ref2, atol=1e-5, rtol=1e-5), "mismatch (ragged N)"

    # bf16 output (halves writeback traffic); f32 accumulation, cast at store.
    out_bf = jax.block_until_ready(
        basic_encoding_columnar(x, w1, b1, w2, b2, lanes=256, tile_rows=16,
                                out_dtype=jnp.bfloat16))
    assert out_bf.dtype == jnp.bfloat16 and out_bf.shape == (NDIM, N)
    assert jnp.allclose(out_bf.T.astype(jnp.float32), ref,
                        atol=5e-2, rtol=5e-2), "mismatch (bf16 out)"

    print("KERNEL_OK")
</pallas_src>

<mosaic_0001>
module attributes {stable_mosaic.version = 11 : i64} {
  func.func @basic_encoding_kernel(%arg0: i32, %arg1: memref<40xf32, #tpu.memory_space<smem>>, %arg2: memref<8x256xf32, #tpu.memory_space<vmem>>, %arg3: memref<5x8x256xf32, #tpu.memory_space<vmem>>) attributes {dimension_semantics = [#tpu.dimension_semantics<parallel>], iteration_bounds = array<i64: 2>, scalar_prefetch = 0 : i64, scratch_operands = 0 : i64, tpu.core_type = #tpu.core_type<tc>, window_params = [{transform_indices = @transform_0, window_bounds = array<i64: 40>}, {transform_indices = @transform_1, window_bounds = array<i64: 8, 256>}, {transform_indices = @transform_2, window_bounds = array<i64: 5, 8, 256>}]} {
    %c0 = arith.constant 0 : index
    %0 = memref.load %arg1[%c0] : memref<40xf32, #tpu.memory_space<smem>>
    %c1 = arith.constant 1 : index
    %1 = memref.load %arg1[%c1] : memref<40xf32, #tpu.memory_space<smem>>
    %c2 = arith.constant 2 : index
    %2 = memref.load %arg1[%c2] : memref<40xf32, #tpu.memory_space<smem>>
    %c3 = arith.constant 3 : index
    %3 = memref.load %arg1[%c3] : memref<40xf32, #tpu.memory_space<smem>>
    %c4 = arith.constant 4 : index
    %4 = memref.load %arg1[%c4] : memref<40xf32, #tpu.memory_space<smem>>
    %c5 = arith.constant 5 : index
    %5 = memref.load %arg1[%c5] : memref<40xf32, #tpu.memory_space<smem>>
    %c6 = arith.constant 6 : index
    %6 = memref.load %arg1[%c6] : memref<40xf32, #tpu.memory_space<smem>>
    %c7 = arith.constant 7 : index
    %7 = memref.load %arg1[%c7] : memref<40xf32, #tpu.memory_space<smem>>
    %c8 = arith.constant 8 : index
    %8 = memref.load %arg1[%c8] : memref<40xf32, #tpu.memory_space<smem>>
    %c9 = arith.constant 9 : index
    %9 = memref.load %arg1[%c9] : memref<40xf32, #tpu.memory_space<smem>>
    %c10 = arith.constant 10 : index
    %10 = memref.load %arg1[%c10] : memref<40xf32, #tpu.memory_space<smem>>
    %c11 = arith.constant 11 : index
    %11 = memref.load %arg1[%c11] : memref<40xf32, #tpu.memory_space<smem>>
    %c12 = arith.constant 12 : index
    %12 = memref.load %arg1[%c12] : memref<40xf32, #tpu.memory_space<smem>>
    %c13 = arith.constant 13 : index
    %13 = memref.load %arg1[%c13] : memref<40xf32, #tpu.memory_space<smem>>
    %c14 = arith.constant 14 : index
    %14 = memref.load %arg1[%c14] : memref<40xf32, #tpu.memory_space<smem>>
    %c15 = arith.constant 15 : index
    %15 = memref.load %arg1[%c15] : memref<40xf32, #tpu.memory_space<smem>>
    %c16 = arith.constant 16 : index
    %16 = memref.load %arg1[%c16] : memref<40xf32, #tpu.memory_space<smem>>
    %c17 = arith.constant 17 : index
    %17 = memref.load %arg1[%c17] : memref<40xf32, #tpu.memory_space<smem>>
    %c18 = arith.constant 18 : index
    %18 = memref.load %arg1[%c18] : memref<40xf32, #tpu.memory_space<smem>>
    %c19 = arith.constant 19 : index
    %19 = memref.load %arg1[%c19] : memref<40xf32, #tpu.memory_space<smem>>
    %c20 = arith.constant 20 : index
    %20 = memref.load %arg1[%c20] : memref<40xf32, #tpu.memory_space<smem>>
    %c21 = arith.constant 21 : index
    %21 = memref.load %arg1[%c21] : memref<40xf32, #tpu.memory_space<smem>>
    %c22 = arith.constant 22 : index
    %22 = memref.load %arg1[%c22] : memref<40xf32, #tpu.memory_space<smem>>
    %c23 = arith.constant 23 : index
    %23 = memref.load %arg1[%c23] : memref<40xf32, #tpu.memory_space<smem>>
    %c24 = arith.constant 24 : index
    %24 = memref.load %arg1[%c24] : memref<40xf32, #tpu.memory_space<smem>>
    %c25 = arith.constant 25 : index
    %25 = memref.load %arg1[%c25] : memref<40xf32, #tpu.memory_space<smem>>
    %c26 = arith.constant 26 : index
    %26 = memref.load %arg1[%c26] : memref<40xf32, #tpu.memory_space<smem>>
    %c27 = arith.constant 27 : index
    %27 = memref.load %arg1[%c27] : memref<40xf32, #tpu.memory_space<smem>>
    %c28 = arith.constant 28 : index
    %28 = memref.load %arg1[%c28] : memref<40xf32, #tpu.memory_space<smem>>
    %c29 = arith.constant 29 : index
    %29 = memref.load %arg1[%c29] : memref<40xf32, #tpu.memory_space<smem>>
    %c30 = arith.constant 30 : index
    %30 = memref.load %arg1[%c30] : memref<40xf32, #tpu.memory_space<smem>>
    %c31 = arith.constant 31 : index
    %31 = memref.load %arg1[%c31] : memref<40xf32, #tpu.memory_space<smem>>
    %c32 = arith.constant 32 : index
    %32 = memref.load %arg1[%c32] : memref<40xf32, #tpu.memory_space<smem>>
    %c33 = arith.constant 33 : index
    %33 = memref.load %arg1[%c33] : memref<40xf32, #tpu.memory_space<smem>>
    %c34 = arith.constant 34 : index
    %34 = memref.load %arg1[%c34] : memref<40xf32, #tpu.memory_space<smem>>
    %c35 = arith.constant 35 : index
    %35 = memref.load %arg1[%c35] : memref<40xf32, #tpu.memory_space<smem>>
    %c36 = arith.constant 36 : index
    %36 = memref.load %arg1[%c36] : memref<40xf32, #tpu.memory_space<smem>>
    %c37 = arith.constant 37 : index
    %37 = memref.load %arg1[%c37] : memref<40xf32, #tpu.memory_space<smem>>
    %c38 = arith.constant 38 : index
    %38 = memref.load %arg1[%c38] : memref<40xf32, #tpu.memory_space<smem>>
    %c39 = arith.constant 39 : index
    %39 = memref.load %arg1[%c39] : memref<40xf32, #tpu.memory_space<smem>>
    %c0_0 = arith.constant 0 : index
    %c0_1 = arith.constant 0 : index
    %40 = vector.load %arg2[%c0_0, %c0_1] : memref<8x256xf32, #tpu.memory_space<vmem>>, vector<8x256xf32>
    %41 = vector.broadcast %0 : f32 to vector<8x256xf32>
    %42 = arith.mulf %40, %41 : vector<8x256xf32>
    %43 = vector.broadcast %5 : f32 to vector<8x256xf32>
    %44 = arith.addf %42, %43 : vector<8x256xf32>
    %cst = arith.constant 0.00999999977 : f32
    %45 = vector.broadcast %cst : f32 to vector<8x256xf32>
    %46 = arith.mulf %45, %44 : vector<8x256xf32>
    %47 = arith.maximumf %44, %46 : vector<8x256xf32>
    %48 = vector.broadcast %1 : f32 to vector<8x256xf32>
    %49 = arith.mulf %40, %48 : vector<8x256xf32>
    %50 = vector.broadcast %6 : f32 to vector<8x256xf32>
    %51 = arith.addf %49, %50 : vector<8x256xf32>
    %cst_2 = arith.constant 0.00999999977 : f32
    %52 = vector.broadcast %cst_2 : f32 to vector<8x256xf32>
    %53 = arith.mulf %52, %51 : vector<8x256xf32>
    %54 = arith.maximumf %51, %53 : vector<8x256xf32>
    %55 = vector.broadcast %2 : f32 to vector<8x256xf32>
    %56 = arith.mulf %40, %55 : vector<8x256xf32>
    %57 = vector.broadcast %7 : f32 to vector<8x256xf32>
    %58 = arith.addf %56, %57 : vector<8x256xf32>
    %cst_3 = arith.constant 0.00999999977 : f32
    %59 = vector.broadcast %cst_3 : f32 to vector<8x256xf32>
    %60 = arith.mulf %59, %58 : vector<8x256xf32>
    %61 = arith.maximumf %58, %60 : vector<8x256xf32>
    %62 = vector.broadcast %3 : f32 to vector<8x256xf32>
    %63 = arith.mulf %40, %62 : vector<8x256xf32>
    %64 = vector.broadcast %8 : f32 to vector<8x256xf32>
    %65 = arith.addf %63, %64 : vector<8x256xf32>
    %cst_4 = arith.constant 0.00999999977 : f32
    %66 = vector.broadcast %cst_4 : f32 to vector<8x256xf32>
    %67 = arith.mulf %66, %65 : vector<8x256xf32>
    %68 = arith.maximumf %65, %67 : vector<8x256xf32>
    %69 = vector.broadcast %4 : f32 to vector<8x256xf32>
    %70 = arith.mulf %40, %69 : vector<8x256xf32>
    %71 = vector.broadcast %9 : f32 to vector<8x256xf32>
    %72 = arith.addf %70, %71 : vector<8x256xf32>
    %cst_5 = arith.constant 0.00999999977 : f32
    %73 = vector.broadcast %cst_5 : f32 to vector<8x256xf32>
    %74 = arith.mulf %73, %72 : vector<8x256xf32>
    %75 = arith.maximumf %72, %74 : vector<8x256xf32>
    %76 = vector.broadcast %10 : f32 to vector<8x256xf32>
    %77 = arith.mulf %47, %76 : vector<8x256xf32>
    %78 = vector.broadcast %35 : f32 to vector<8x256xf32>
    %79 = arith.addf %77, %78 : vector<8x256xf32>
    %80 = vector.broadcast %15 : f32 to vector<8x256xf32>
    %81 = arith.mulf %54, %80 : vector<8x256xf32>
    %82 = arith.addf %79, %81 : vector<8x256xf32>
    %83 = vector.broadcast %20 : f32 to vector<8x256xf32>
    %84 = arith.mulf %61, %83 : vector<8x256xf32>
    %85 = arith.addf %82, %84 : vector<8x256xf32>
    %86 = vector.broadcast %25 : f32 to vector<8x256xf32>
    %87 = arith.mulf %68, %86 : vector<8x256xf32>
    %88 = arith.addf %85, %87 : vector<8x256xf32>
    %89 = vector.broadcast %30 : f32 to vector<8x256xf32>
    %90 = arith.mulf %75, %89 : vector<8x256xf32>
    %91 = arith.addf %88, %90 : vector<8x256xf32>
    %cst_6 = arith.constant 0.00999999977 : f32
    %92 = vector.broadcast %cst_6 : f32 to vector<8x256xf32>
    %93 = arith.mulf %92, %91 : vector<8x256xf32>
    %94 = arith.maximumf %91, %93 : vector<8x256xf32>
    %c0_7 = arith.constant 0 : index
    %c0_8 = arith.constant 0 : index
    %c0_9 = arith.constant 0 : index
    %95 = vector.load %arg3[%c0_7, %c0_8, %c0_9] : memref<5x8x256xf32, #tpu.memory_space<vmem>>, vector<1x8x256xf32>
    %96 = vector.shape_cast %95 : vector<1x8x256xf32> to vector<8x256xf32>
    %97 = vector.shape_cast %94 : vector<8x256xf32> to vector<1x8x256xf32>
    tpu.vector_store %arg3[%c0_7, %c0_8, %c0_9], %97 {strides = array<i32>} : memref<5x8x256xf32, #tpu.memory_space<vmem>>, vector<1x8x256xf32>,
    %98 = vector.broadcast %11 : f32 to vector<8x256xf32>
    %99 = arith.mulf %47, %98 : vector<8x256xf32>
    %100 = vector.broadcast %36 : f32 to vector<8x256xf32>
    %101 = arith.addf %99, %100 : vector<8x256xf32>
    %102 = vector.broadcast %16 : f32 to vector<8x256xf32>
    %103 = arith.mulf %54, %102 : vector<8x256xf32>
    %104 = arith.addf %101, %103 : vector<8x256xf32>
    %105 = vector.broadcast %21 : f32 to vector<8x256xf32>
    %106 = arith.mulf %61, %105 : vector<8x256xf32>
    %107 = arith.addf %104, %106 : vector<8x256xf32>
    %108 = vector.broadcast %26 : f32 to vector<8x256xf32>
    %109 = arith.mulf %68, %108 : vector<8x256xf32>
    %110 = arith.addf %107, %109 : vector<8x256xf32>
    %111 = vector.broadcast %31 : f32 to vector<8x256xf32>
    %112 = arith.mulf %75, %111 : vector<8x256xf32>
    %113 = arith.addf %110, %112 : vector<8x256xf32>
    %cst_10 = arith.constant 0.00999999977 : f32
    %114 = vector.broadcast %cst_10 : f32 to vector<8x256xf32>
    %115 = arith.mulf %114, %113 : vector<8x256xf32>
    %116 = arith.maximumf %113, %115 : vector<8x256xf32>
    %c1_11 = arith.constant 1 : index
    %c0_12 = arith.constant 0 : index
    %c0_13 = arith.constant 0 : index
    %117 = vector.load %arg3[%c1_11, %c0_12, %c0_13] : memref<5x8x256xf32, #tpu.memory_space<vmem>>, vector<1x8x256xf32>
    %118 = vector.shape_cast %117 : vector<1x8x256xf32> to vector<8x256xf32>
    %119 = vector.shape_cast %116 : vector<8x256xf32> to vector<1x8x256xf32>
    tpu.vector_store %arg3[%c1_11, %c0_12, %c0_13], %119 {strides = array<i32>} : memref<5x8x256xf32, #tpu.memory_space<vmem>>, vector<1x8x256xf32>,
    %120 = vector.broadcast %12 : f32 to vector<8x256xf32>
    %121 = arith.mulf %47, %120 : vector<8x256xf32>
    %122 = vector.broadcast %37 : f32 to vector<8x256xf32>
    %123 = arith.addf %121, %122 : vector<8x256xf32>
    %124 = vector.broadcast %17 : f32 to vector<8x256xf32>
    %125 = arith.mulf %54, %124 : vector<8x256xf32>
    %126 = arith.addf %123, %125 : vector<8x256xf32>
    %127 = vector.broadcast %22 : f32 to vector<8x256xf32>
    %128 = arith.mulf %61, %127 : vector<8x256xf32>
    %129 = arith.addf %126, %128 : vector<8x256xf32>
    %130 = vector.broadcast %27 : f32 to vector<8x256xf32>
    %131 = arith.mulf %68, %130 : vector<8x256xf32>
    %132 = arith.addf %129, %131 : vector<8x256xf32>
    %133 = vector.broadcast %32 : f32 to vector<8x256xf32>
    %134 = arith.mulf %75, %133 : vector<8x256xf32>
    %135 = arith.addf %132, %134 : vector<8x256xf32>
    %cst_14 = arith.constant 0.00999999977 : f32
    %136 = vector.broadcast %cst_14 : f32 to vector<8x256xf32>
    %137 = arith.mulf %136, %135 : vector<8x256xf32>
    %138 = arith.maximumf %135, %137 : vector<8x256xf32>
    %c2_15 = arith.constant 2 : index
    %c0_16 = arith.constant 0 : index
    %c0_17 = arith.constant 0 : index
    %139 = vector.load %arg3[%c2_15, %c0_16, %c0_17] : memref<5x8x256xf32, #tpu.memory_space<vmem>>, vector<1x8x256xf32>
    %140 = vector.shape_cast %139 : vector<1x8x256xf32> to vector<8x256xf32>
    %141 = vector.shape_cast %138 : vector<8x256xf32> to vector<1x8x256xf32>
    tpu.vector_store %arg3[%c2_15, %c0_16, %c0_17], %141 {strides = array<i32>} : memref<5x8x256xf32, #tpu.memory_space<vmem>>, vector<1x8x256xf32>,
    %142 = vector.broadcast %13 : f32 to vector<8x256xf32>
    %143 = arith.mulf %47, %142 : vector<8x256xf32>
    %144 = vector.broadcast %38 : f32 to vector<8x256xf32>
    %145 = arith.addf %143, %144 : vector<8x256xf32>
    %146 = vector.broadcast %18 : f32 to vector<8x256xf32>
    %147 = arith.mulf %54, %146 : vector<8x256xf32>
    %148 = arith.addf %145, %147 : vector<8x256xf32>
    %149 = vector.broadcast %23 : f32 to vector<8x256xf32>
    %150 = arith.mulf %61, %149 : vector<8x256xf32>
    %151 = arith.addf %148, %150 : vector<8x256xf32>
    %152 = vector.broadcast %28 : f32 to vector<8x256xf32>
    %153 = arith.mulf %68, %152 : vector<8x256xf32>
    %154 = arith.addf %151, %153 : vector<8x256xf32>
    %155 = vector.broadcast %33 : f32 to vector<8x256xf32>
    %156 = arith.mulf %75, %155 : vector<8x256xf32>
    %157 = arith.addf %154, %156 : vector<8x256xf32>
    %cst_18 = arith.constant 0.00999999977 : f32
    %158 = vector.broadcast %cst_18 : f32 to vector<8x256xf32>
    %159 = arith.mulf %158, %157 : vector<8x256xf32>
    %160 = arith.maximumf %157, %159 : vector<8x256xf32>
    %c3_19 = arith.constant 3 : index
    %c0_20 = arith.constant 0 : index
    %c0_21 = arith.constant 0 : index
    %161 = vector.load %arg3[%c3_19, %c0_20, %c0_21] : memref<5x8x256xf32, #tpu.memory_space<vmem>>, vector<1x8x256xf32>
    %162 = vector.shape_cast %161 : vector<1x8x256xf32> to vector<8x256xf32>
    %163 = vector.shape_cast %160 : vector<8x256xf32> to vector<1x8x256xf32>
    tpu.vector_store %arg3[%c3_19, %c0_20, %c0_21], %163 {strides = array<i32>} : memref<5x8x256xf32, #tpu.memory_space<vmem>>, vector<1x8x256xf32>,
    %164 = vector.broadcast %14 : f32 to vector<8x256xf32>
    %165 = arith.mulf %47, %164 : vector<8x256xf32>
    %166 = vector.broadcast %39 : f32 to vector<8x256xf32>
    %167 = arith.addf %165, %166 : vector<8x256xf32>
    %168 = vector.broadcast %19 : f32 to vector<8x256xf32>
    %169 = arith.mulf %54, %168 : vector<8x256xf32>
    %170 = arith.addf %167, %169 : vector<8x256xf32>
    %171 = vector.broadcast %24 : f32 to vector<8x256xf32>
    %172 = arith.mulf %61, %171 : vector<8x256xf32>
    %173 = arith.addf %170, %172 : vector<8x256xf32>
    %174 = vector.broadcast %29 : f32 to vector<8x256xf32>
    %175 = arith.mulf %68, %174 : vector<8x256xf32>
    %176 = arith.addf %173, %175 : vector<8x256xf32>
    %177 = vector.broadcast %34 : f32 to vector<8x256xf32>
    %178 = arith.mulf %75, %177 : vector<8x256xf32>
    %179 = arith.addf %176, %178 : vector<8x256xf32>
    %cst_22 = arith.constant 0.00999999977 : f32
    %180 = vector.broadcast %cst_22 : f32 to vector<8x256xf32>
    %181 = arith.mulf %180, %179 : vector<8x256xf32>
    %182 = arith.maximumf %179, %181 : vector<8x256xf32>
    %c4_23 = arith.constant 4 : index
    %c0_24 = arith.constant 0 : index
    %c0_25 = arith.constant 0 : index
    %183 = vector.load %arg3[%c4_23, %c0_24, %c0_25] : memref<5x8x256xf32, #tpu.memory_space<vmem>>, vector<1x8x256xf32>
    %184 = vector.shape_cast %183 : vector<1x8x256xf32> to vector<8x256xf32>
    %185 = vector.shape_cast %182 : vector<8x256xf32> to vector<1x8x256xf32>
    tpu.vector_store %arg3[%c4_23, %c0_24, %c0_25], %185 {strides = array<i32>} : memref<5x8x256xf32, #tpu.memory_space<vmem>>, vector<1x8x256xf32>,
    return
  }
  func.func @transform_0(%arg0: i32) -> i32 {
    %c0_i32 = arith.constant 0 : i32
    %c0_i32_0 = arith.constant 0 : i32
    return %c0_i32 : i32
  }
  func.func @transform_1(%arg0: i32) -> (i32, i32) {
    %c0_i32 = arith.constant 0 : i32
    %c0_i32_0 = arith.constant 0 : i32
    return %arg0, %c0_i32 : i32, i32
  }
  func.func @transform_2(%arg0: i32) -> (i32, i32, i32) {
    %c0_i32 = arith.constant 0 : i32
    %c0_i32_0 = arith.constant 0 : i32
    %c0_i32_1 = arith.constant 0 : i32
    return %c0_i32, %arg0, %c0_i32_0 : i32, i32, i32
  }
}

</mosaic_0001>

<llo_original>
// kernel: tpu_custom_call.1
$region0: #{tpu_custom_call.1}
  #allocation0 [shape = 'u32[]', space=smem, size = 0x4, offset = 0x4, fixed_abs, tag = 'smem constant byte address 0x4 - core index']
  #allocation1 [shape = 'u32[144,128]{1,0:T(1,128)}', space=vmem, size = 0x12000, scoped, tag = 'internal scratch']
  %s0 = inlined_call_operand.hbm [shape: f32[40], index: 0, kind: input, shape index: {}]
  %s1 = inlined_call_operand.hbm [shape: f32[16,256], index: 1, kind: input, shape index: {}]
  %s2 = inlined_call_operand.hbm [shape: f32[5,16,256], index: 2, kind: output, shape index: {}]
  %s3 = sld [smem:[#allocation0]]
  $region49: #{tpu_custom_call.1} parent=0
    _
  %s5 = ssub.s32 1, %s3
  %s6 = scalar_select 0, %s5, %s3
  $region1: #{tpu_custom_call.1} parent=0
    #allocation2 [shape = 'u8[512]{0}', space=smem, size = 0x200, scoped, tag = 'input window, operand 0, single buffered']
    #allocation3 [shape = 's32[2]{0}', space=sflag, size = 0x8, scoped, tag = 'scoped memory for tpu_custom_call.1']
    #allocation4 [shape = 's32[2]{0}', space=sflag, size = 0x8, scoped, tag = 'scoped memory for tpu_custom_call.1']
    #allocation5 [shape = 's32[2]{0}', space=sflag, size = 0x8, scoped, tag = 'scoped memory for tpu_custom_call.1']
    #allocation6 [shape = 'u8[16384]{0}', space=vmem, size = 0x4000, scoped, tag = 'input window, operand 1']
    #allocation7 [shape = 'u8[81920]{0}', space=vmem, size = 0x14000, scoped, tag = 'output window, operand 0']
    %7 = vsyncpa [#allocation5], 0
    %8 = vsyncpa [#allocation3], 0
    %s9 = scalar_lea.sflag [#allocation3], 1
    %10 = vsyncpa %s9, 0
    %11 = vsyncpa [#allocation4], 0
    %s12 = scalar_lea.sflag [#allocation4], 1
    %13 = vsyncpa %s12, 0
    loop: start=0, step=1, limit=4
    $region2: #{tpu_custom_call.1} parent=1 // loop_pre_header
      _
    $region3: #{tpu_custom_call.1} parent=1 // loop_header
      %s15 = sphi 0, %s19
      %p16 = scmp.ge.s32.totalorder %s15, 4
      %s23 = sphi 0, %s23
      %s25 = sphi 0, %s23
      %s26 = sphi 0, %s25
      %s40 = sphi 0, %s26
      %s46 = sphi 0, %s48
      %s49 = sphi 0, %s46
      %s50 = sphi 0, %s49
      %s66 = sphi 0, %s50
      %s72 = sphi 0, %s74
      %s75 = sphi 0, %s72
      %s76 = sphi 0, %s75
      %s92 = sphi 0, %s76
    $region4: #{tpu_custom_call.1} parent=1 // loop_header_branch
      %18 = sbr.rel (%p16) target = $region8
    $region5: #{tpu_custom_call.1} parent=1 // loop_body
      %s20 = ssub.s32 %s15, 1
      %s21 = ssub.s32 %s15, 2
      %s22 = sadd.s32 %s15, 1
      %s24 = sadd.s32 %s23, 1
      %p27 = scmp.eq.s32.totalorder %s15, 1
      %p28 = scmp.ne.s32.totalorder %s23, %s25
      %p29 = scmp.eq.s32.totalorder %s15, 0
      %p30 = por %p28, %p29
      %p31 = scmp.ne.s32.totalorder %s23, %s25
      %p32 = scmp.eq.s32.totalorder %s20, 1
      %p33 = por %p31, %p32
      %p34 = scmp.ne.s32.totalorder %s25, %s26
      %p35 = scmp.eq.s32.totalorder %s20, 0
      %p36 = por %p34, %p35
      %p37 = scmp.ne.s32.totalorder %s25, %s26
      %p38 = scmp.eq.s32.totalorder %s21, 1
      %p39 = por %p37, %p38
      %p41 = scmp.ne.s32.totalorder %s26, %s40
      %p42 = scmp.eq.s32.totalorder %s21, 0
      %p43 = por %p41, %p42
      %s44 = ssub.s32 %s15, %s22
      %p45 = scmp.eq.s32.totalorder %s44, 0
      %s47 = sadd.s32 %s46, 1
      %s48 = scalar_select %p45, %s46, %s47
      %p51 = pneg %p45
      %p52 = scmp.eq.s32.totalorder %s15, 1
      %p53 = por %p51, %p52
      %p54 = scmp.ne.s32.totalorder %s46, %s49
      %p55 = scmp.eq.s32.totalorder %s15, 0
      %p56 = por %p54, %p55
      %p57 = scmp.ne.s32.totalorder %s46, %s49
      %p58 = scmp.eq.s32.totalorder %s20, 1
      %p59 = por %p57, %p58
      %p60 = scmp.ne.s32.totalorder %s49, %s50
      %p61 = scmp.eq.s32.totalorder %s20, 0
      %p62 = por %p60, %p61
      %p63 = scmp.ne.s32.totalorder %s49, %s50
      %p64 = scmp.eq.s32.totalorder %s21, 1
      %p65 = por %p63, %p64
      %p67 = scmp.ne.s32.totalorder %s50, %s66
      %p68 = scmp.eq.s32.totalorder %s21, 0
      %p69 = por %p67, %p68
      %s70 = ssub.s32 %s15, %s22
      %p71 = scmp.eq.s32.totalorder %s70, 0
      %s73 = sadd.s32 %s72, 1
      %s74 = scalar_select %p71, %s72, %s73
      %p77 = pneg %p71
      %p78 = scmp.eq.s32.totalorder %s15, 1
      %p79 = por %p77, %p78
      %p80 = scmp.ne.s32.totalorder %s72, %s75
      %p81 = scmp.eq.s32.totalorder %s15, 0
      %p82 = por %p80, %p81
      %p83 = scmp.ne.s32.totalorder %s72, %s75
      %p84 = scmp.eq.s32.totalorder %s20, 1
      %p85 = por %p83, %p84
      %p86 = scmp.ne.s32.totalorder %s75, %s76
      %p87 = scmp.eq.s32.totalorder %s20, 0
      %p88 = por %p86, %p87
      %p89 = scmp.ne.s32.totalorder %s75, %s76
      %p90 = scmp.eq.s32.totalorder %s21, 1
      %p91 = por %p89, %p90
      %p93 = scmp.ne.s32.totalorder %s76, %s92
      %p94 = scmp.eq.s32.totalorder %s21, 0
      %p95 = por %p93, %p94
      %p96 = scmp.le.s32.totalorder 1, %s15
      %p97 = scmp.lt.s32.totalorder %s15, 3
      %p98 = pnand %p96, %p97
      %p99 = pneg %p98
      // Predicated region
      $region9: #{tpu_custom_call.1} parent=5 // pred_check
        _
      $region10: #{tpu_custom_call.1} parent=5 // pred_check_branch
        %101 = sbr.rel (%p98) target = $region12
      $region11: #{tpu_custom_call.1} parent=5 // pred_region
        %s102 = ssub.s32 %s15, 1
        // Predicated region
        $region13: #{tpu_custom_call.1} parent=11 // pred_check
          %p103 = pneg %p36
        $region14: #{tpu_custom_call.1} parent=11 // pred_check_branch
          %105 = sbr.rel (%p103) target = $region16
        $region15: #{tpu_custom_call.1} parent=11 // pred_region
          %s107 = ssub.s32 16, 16
          %108 = vsyncadd [#allocation5], %s107
          %111 = dma.hbm_to_smem %s0, 16, [#allocation2], [#allocation5]
        $region16: #{tpu_custom_call.1} parent=11 // pred_fallthru
          _
      $region12: #{tpu_custom_call.1} parent=5 // pred_fallthru
        _
      %p112 = scmp.lt.s32.totalorder %s15, 2
      // Predicated region
      $region17: #{tpu_custom_call.1} parent=5 // pred_check
        %p113 = pneg %p112
      $region18: #{tpu_custom_call.1} parent=5 // pred_check_branch
        %115 = sbr.rel (%p113) target = $region20
      $region19: #{tpu_custom_call.1} parent=5 // pred_region
        // Predicated region
        $region21: #{tpu_custom_call.1} parent=19 // pred_check
          %p116 = pneg %p56
        $region22: #{tpu_custom_call.1} parent=19 // pred_check_branch
          %118 = sbr.rel (%p116) target = $region24
        $region23: #{tpu_custom_call.1} parent=19 // pred_region
          %s119 = sand.u32 %s46, 1
          %s120 = scalar_lea.sflag [#allocation3], %s119
          %s121 = sand.u32 %s46, 1
          %s122 = smul.addr %s121, 16
          %s123 = scalar_lea.vmem [#allocation6], %s122
          %s125 = ssub.s32 256, 256
          %126 = vsyncadd %s120, %s125
          %s127 = smul.addr %s15, 2
          %s128 = smul.addr %s127, 128
          %s129 = scalar_lea.hbm %s1, %s128
          %s131 = sshll.u32 %s123, 4
          %s132 = int_to_ptr.vmem [resolvable:$true] %s131
          %134 = dma.hbm_to_vmem [thread:$0]  %s129, 256, %s132, %s120
        $region24: #{tpu_custom_call.1} parent=19 // pred_fallthru
          _
      $region20: #{tpu_custom_call.1} parent=5 // pred_fallthru
        _
      %p135 = scmp.le.s32.totalorder 1, %s15
      %p136 = scmp.lt.s32.totalorder %s15, 3
      %p137 = pnand %p135, %p136
      %p138 = pneg %p137
      // Predicated region
      $region25: #{tpu_custom_call.1} parent=5 // pred_check
        _
      $region26: #{tpu_custom_call.1} parent=5 // pred_check_branch
        %140 = sbr.rel (%p137) target = $region28
      $region27: #{tpu_custom_call.1} parent=5 // pred_region
        %s141 = ssub.s32 %s15, 1
        // Predicated region
        $region29: #{tpu_custom_call.1} parent=27 // pred_check
          %p142 = pneg %p36
        $region30: #{tpu_custom_call.1} parent=27 // pred_check_branch
          %144 = sbr.rel (%p142) target = $region32
        $region31: #{tpu_custom_call.1} parent=27 // pred_region
          %145 = dma.done [#allocation5], 16
        $region32: #{tpu_custom_call.1} parent=27 // pred_fallthru
          _
        %s146 = sand.u32 %s49, 1
        %s147 = scalar_lea.sflag [#allocation3], %s146
        %s148 = sand.u32 %s49, 1
        %s149 = smul.addr %s148, 16
        %s150 = scalar_lea.vmem [#allocation6], %s149
        // Predicated region
        $region33: #{tpu_custom_call.1} parent=27 // pred_check
          %p151 = pneg %p62
        $region34: #{tpu_custom_call.1} parent=27 // pred_check_branch
          %153 = sbr.rel (%p151) target = $region36
        $region35: #{tpu_custom_call.1} parent=27 // pred_region
          %154 = dma.done %s147, 256
        $region36: #{tpu_custom_call.1} parent=27 // pred_fallthru
          _
        %155 = sfence
        %p156 = pneg %p36
        %p157 = pneg %p33
        %s158 = sand.u32 %s49, 1
        %s159 = scalar_lea.sflag [#allocation3], %s158
        %s160 = sand.u32 %s49, 1
        %s161 = smul.addr %s160, 16
        %s162 = scalar_lea.vmem [#allocation6], %s161
        %p163 = pneg %p62
        %p164 = pneg %p59
        %p165 = pneg %p88
        %p166 = pneg %p85
        %s167 = sand.u32 %s75, 1
        %s168 = scalar_lea.sflag [#allocation4], %s167
        %s169 = sand.u32 %s75, 1
        %s170 = smul.addr %s169, 80
        %s171 = scalar_lea.vmem [#allocation7], %s170
        %s172 = sld [smem:[#allocation2]]
        %s173 = sld [smem:[#allocation2 + $0x1]]
        %s174 = sld [smem:[#allocation2 + $0x2]]
        %s175 = sld [smem:[#allocation2 + $0x3]]
        %s176 = sld [smem:[#allocation2 + $0x4]]
        %s177 = sld [smem:[#allocation2 + $0x5]]
        %s178 = sld [smem:[#allocation2 + $0x6]]
        %s179 = sld [smem:[#allocation2 + $0x7]]
        %s180 = sld [smem:[#allocation2 + $0x8]]
        %s181 = sld [smem:[#allocation2 + $0x9]]
        %s182 = sld [smem:[#allocation2 + $0xa]]
        %s183 = sld [smem:[#allocation2 + $0xb]]
        %s184 = sld [smem:[#allocation2 + $0xc]]
        %s185 = sld [smem:[#allocation2 + $0xd]]
        %s186 = sld [smem:[#allocation2 + $0xe]]
        %s187 = sld [smem:[#allocation2 + $0xf]]
        %s188 = sld [smem:[#allocation2 + $0x10]]
        %s189 = sld [smem:[#allocation2 + $0x11]]
        %s190 = sld [smem:[#allocation2 + $0x12]]
        %s191 = sld [smem:[#allocation2 + $0x13]]
        %s192 = sld [smem:[#allocation2 + $0x14]]
        %s193 = sld [smem:[#allocation2 + $0x15]]
        %s194 = sld [smem:[#allocation2 + $0x16]]
        %s195 = sld [smem:[#allocation2 + $0x17]]
        %s196 = sld [smem:[#allocation2 + $0x18]]
        %s197 = sld [smem:[#allocation2 + $0x19]]
        %s198 = sld [smem:[#allocation2 + $0x1a]]
        %s199 = sld [smem:[#allocation2 + $0x1b]]
        %s200 = sld [smem:[#allocation2 + $0x1c]]
        %s201 = sld [smem:[#allocation2 + $0x1d]]
        %s202 = sld [smem:[#allocation2 + $0x1e]]
        %s203 = sld [smem:[#allocation2 + $0x1f]]
        %s204 = sld [smem:[#allocation2 + $0x20]]
        %s205 = sld [smem:[#allocation2 + $0x21]]
        %s206 = sld [smem:[#allocation2 + $0x22]]
        %s207 = sld [smem:[#allocation2 + $0x23]]
        %s208 = sld [smem:[#allocation2 + $0x24]]
        %s209 = sld [smem:[#allocation2 + $0x25]]
        %s210 = sld [smem:[#allocation2 + $0x26]]
        %s211 = sld [smem:[#allocation2 + $0x27]]
        %v212 = vld [vmem:[%s150] sm:$0xff]
        %v213 = vld [vmem:[%s150 + $0x8] sm:$0xff]
        %v214 = vstv %s172
        %v215 = vmul.f32 %v212, %v214
        %v216 = vmul.f32 %v213, %v214
        %v217 = vstv %s177
        %v218 = vadd.f32 %v215, %v217
        %v219 = vadd.f32 %v216, %v217
        %v220 = vmul.f32 %v218, 0.01
        %v221 = vmul.f32 %v219, 0.01
        %v222 = vmax.f32 %v218, %v220
        %v223 = vmax.f32 %v219, %v221
        %v224 = vstv %s173
        %v225 = vmul.f32 %v212, %v224
        %v226 = vmul.f32 %v213, %v224
        %v227 = vstv %s178
        %v228 = vadd.f32 %v225, %v227
        %v229 = vadd.f32 %v226, %v227
        %v230 = vmul.f32 %v228, 0.01
        %v231 = vmul.f32 %v229, 0.01
        %v232 = vmax.f32 %v228, %v230
        %v233 = vmax.f32 %v229, %v231
        %v234 = vstv %s174
        %v235 = vmul.f32 %v212, %v234
        %v236 = vmul.f32 %v213, %v234
        %v237 = vstv %s179
        %v238 = vadd.f32 %v235, %v237
        %v239 = vadd.f32 %v236, %v237
        %v240 = vmul.f32 %v238, 0.01
        %v241 = vmul.f32 %v239, 0.01
        %v242 = vmax.f32 %v238, %v240
        %v243 = vmax.f32 %v239, %v241
        %v244 = vstv %s175
        %v245 = vmul.f32 %v212, %v244
        %v246 = vmul.f32 %v213, %v244
        %v247 = vstv %s180
        %v248 = vadd.f32 %v245, %v247
        %v249 = vadd.f32 %v246, %v247
        %v250 = vmul.f32 %v248, 0.01
        %v251 = vmul.f32 %v249, 0.01
        %v252 = vmax.f32 %v248, %v250
        %v253 = vmax.f32 %v249, %v251
        %v254 = vstv %s176
        %v255 = vmul.f32 %v212, %v254
        %v256 = vmul.f32 %v213, %v254
        %v257 = vstv %s181
        %v258 = vadd.f32 %v255, %v257
        %v259 = vadd.f32 %v256, %v257
        %v260 = vmul.f32 %v258, 0.01
        %v261 = vmul.f32 %v259, 0.01
        %v262 = vmax.f32 %v258, %v260
        %v263 = vmax.f32 %v259, %v261
        %v264 = vstv %s182
        %v265 = vmul.f32 %v222, %v264
        %v266 = vmul.f32 %v223, %v264
        %v267 = vstv %s207
        %v268 = vadd.f32 %v265, %v267
        %v269 = vadd.f32 %v266, %v267
        %v270 = vstv %s187
        %v271 = vmul.f32 %v232, %v270
        %v272 = vmul.f32 %v233, %v270
        %v273 = vadd.f32 %v268, %v271
        %v274 = vadd.f32 %v269, %v272
        %v275 = vstv %s192
        %v276 = vmul.f32 %v242, %v275
        %v277 = vmul.f32 %v243, %v275
        %v278 = vadd.f32 %v273, %v276
        %v279 = vadd.f32 %v274, %v277
        %v280 = vstv %s197
        %v281 = vmul.f32 %v252, %v280
        %v282 = vmul.f32 %v253, %v280
        %v283 = vadd.f32 %v278, %v281
        %v284 = vadd.f32 %v279, %v282
        %v285 = vstv %s202
        %v286 = vmul.f32 %v262, %v285
        %v287 = vmul.f32 %v263, %v285
        %v288 = vadd.f32 %v283, %v286
        %v289 = vadd.f32 %v284, %v287
        %v290 = vmul.f32 %v288, 0.01
        %v291 = vmul.f32 %v289, 0.01
        %v292 = vmax.f32 %v288, %v290
        %v293 = vmax.f32 %v289, %v291
        %294 = vst [vmem:[%s171] sm:$0xff] %v292
        %295 = vst [vmem:[%s171 + $0x8] sm:$0xff] %v293
        %v296 = vstv %s183
        %v297 = vmul.f32 %v222, %v296
        %v298 = vmul.f32 %v223, %v296
        %v299 = vstv %s208
        %v300 = vadd.f32 %v297, %v299
        %v301 = vadd.f32 %v298, %v299
        %v302 = vstv %s188
        %v303 = vmul.f32 %v232, %v302
        %v304 = vmul.f32 %v233, %v302
        %v305 = vadd.f32 %v300, %v303
        %v306 = vadd.f32 %v301, %v304
        %v307 = vstv %s193
        %v308 = vmul.f32 %v242, %v307
        %v309 = vmul.f32 %v243, %v307
        %v310 = vadd.f32 %v305, %v308
        %v311 = vadd.f32 %v306, %v309
        %v312 = vstv %s198
        %v313 = vmul.f32 %v252, %v312
        %v314 = vmul.f32 %v253, %v312
        %v315 = vadd.f32 %v310, %v313
        %v316 = vadd.f32 %v311, %v314
        %v317 = vstv %s203
        %v318 = vmul.f32 %v262, %v317
        %v319 = vmul.f32 %v263, %v317
        %v320 = vadd.f32 %v315, %v318
        %v321 = vadd.f32 %v316, %v319
        %v322 = vmul.f32 %v320, 0.01
        %v323 = vmul.f32 %v321, 0.01
        %v324 = vmax.f32 %v320, %v322
        %v325 = vmax.f32 %v321, %v323
        %s326 = scalar_lea.vmem %s171, 16 [#allocation7]
        %327 = vst [vmem:[%s326] sm:$0xff] %v324
        %328 = vst [vmem:[%s326 + $0x8] sm:$0xff] %v325
        %v329 = vstv %s184
        %v330 = vmul.f32 %v222, %v329
        %v331 = vmul.f32 %v223, %v329
        %v332 = vstv %s209
        %v333 = vadd.f32 %v330, %v332
        %v334 = vadd.f32 %v331, %v332
        %v335 = vstv %s189
        %v336 = vmul.f32 %v232, %v335
        %v337 = vmul.f32 %v233, %v335
        %v338 = vadd.f32 %v333, %v336
        %v339 = vadd.f32 %v334, %v337
        %v340 = vstv %s194
        %v341 = vmul.f32 %v242, %v340
        %v342 = vmul.f32 %v243, %v340
        %v343 = vadd.f32 %v338, %v341
        %v344 = vadd.f32 %v339, %v342
        %v345 = vstv %s199
        %v346 = vmul.f32 %v252, %v345
        %v347 = vmul.f32 %v253, %v345
        %v348 = vadd.f32 %v343, %v346
        %v349 = vadd.f32 %v344, %v347
        %v350 = vstv %s204
        %v351 = vmul.f32 %v262, %v350
        %v352 = vmul.f32 %v263, %v350
        %v353 = vadd.f32 %v348, %v351
        %v354 = vadd.f32 %v349, %v352
        %v355 = vmul.f32 %v353, 0.01
        %v356 = vmul.f32 %v354, 0.01
        %v357 = vmax.f32 %v353, %v355
        %v358 = vmax.f32 %v354, %v356
        %s359 = scalar_lea.vmem %s171, 32 [#allocation7]
        %360 = vst [vmem:[%s359] sm:$0xff] %v357
        %361 = vst [vmem:[%s359 + $0x8] sm:$0xff] %v358
        %v362 = vstv %s185
        %v363 = vmul.f32 %v222, %v362
        %v364 = vmul.f32 %v223, %v362
        %v365 = vstv %s210
        %v366 = vadd.f32 %v363, %v365
        %v367 = vadd.f32 %v364, %v365
        %v368 = vstv %s190
        %v369 = vmul.f32 %v232, %v368
        %v370 = vmul.f32 %v233, %v368
        %v371 = vadd.f32 %v366, %v369
        %v372 = vadd.f32 %v367, %v370
        %v373 = vstv %s195
        %v374 = vmul.f32 %v242, %v373
        %v375 = vmul.f32 %v243, %v373
        %v376 = vadd.f32 %v371, %v374
        %v377 = vadd.f32 %v372, %v375
        %v378 = vstv %s200
        %v379 = vmul.f32 %v252, %v378
        %v380 = vmul.f32 %v253, %v378
        %v381 = vadd.f32 %v376, %v379
        %v382 = vadd.f32 %v377, %v380
        %v383 = vstv %s205
        %v384 = vmul.f32 %v262, %v383
        %v385 = vmul.f32 %v263, %v383
        %v386 = vadd.f32 %v381, %v384
        %v387 = vadd.f32 %v382, %v385
        %v388 = vmul.f32 %v386, 0.01
        %v389 = vmul.f32 %v387, 0.01
        %v390 = vmax.f32 %v386, %v388
        %v391 = vmax.f32 %v387, %v389
        %s392 = scalar_lea.vmem %s171, 48 [#allocation7]
        %393 = vst [vmem:[%s392] sm:$0xff] %v390
        %394 = vst [vmem:[%s392 + $0x8] sm:$0xff] %v391
        %v395 = vstv %s186
        %v396 = vmul.f32 %v222, %v395
        %v397 = vmul.f32 %v223, %v395
        %v398 = vstv %s211
        %v399 = vadd.f32 %v396, %v398
        %v400 = vadd.f32 %v397, %v398
        %v401 = vstv %s191
        %v402 = vmul.f32 %v232, %v401
        %v403 = vmul.f32 %v233, %v401
        %v404 = vadd.f32 %v399, %v402
        %v405 = vadd.f32 %v400, %v403
        %v406 = vstv %s196
        %v407 = vmul.f32 %v242, %v406
        %v408 = vmul.f32 %v243, %v406
        %v409 = vadd.f32 %v404, %v407
        %v410 = vadd.f32 %v405, %v408
        %v411 = vstv %s201
        %v412 = vmul.f32 %v252, %v411
        %v413 = vmul.f32 %v253, %v411
        %v414 = vadd.f32 %v409, %v412
        %v415 = vadd.f32 %v410, %v413
        %v416 = vstv %s206
        %v417 = vmul.f32 %v262, %v416
        %v418 = vmul.f32 %v263, %v416
        %v419 = vadd.f32 %v414, %v417
        %v420 = vadd.f32 %v415, %v418
        %v421 = vmul.f32 %v419, 0.01
        %v422 = vmul.f32 %v420, 0.01
        %v423 = vmax.f32 %v419, %v421
        %v424 = vmax.f32 %v420, %v422
        %s425 = scalar_lea.vmem %s171, 64 [#allocation7]
        %426 = vst [vmem:[%s425] sm:$0xff] %v423
        %427 = vst [vmem:[%s425 + $0x8] sm:$0xff] %v424
        %s428 = sand.u32 %s75, 1
        %s429 = scalar_lea.sflag [#allocation4], %s428
        %s430 = sand.u32 %s75, 1
        %s431 = smul.addr %s430, 80
        %s432 = scalar_lea.vmem [#allocation7], %s431
        // Predicated region
        $region37: #{tpu_custom_call.1} parent=27 // pred_check
          %p433 = pneg %p85
        $region38: #{tpu_custom_call.1} parent=27 // pred_check_branch
          %435 = sbr.rel (%p433) target = $region40
        $region39: #{tpu_custom_call.1} parent=27 // pred_region
          %s437 = ssub.s32 1280, 1280
          %438 = vsyncadd %s429, %s437
          %s439 = smul.addr %s20, 2
          %s440 = smul.addr %s439, 128
          %s441 = scalar_lea.hbm %s2, %s440
          %s442 = sshll.u32 %s432, 4
          %s443 = int_to_ptr.vmem [resolvable:$true] %s442
          %448 = dma.vmem_to_hbm [thread:$0]  %s443, 1280, %s441, %s429, 256, 512, 16
        $region40: #{tpu_custom_call.1} parent=27 // pred_fallthru
          _
      $region28: #{tpu_custom_call.1} parent=5 // pred_fallthru
        _
      %p449 = scmp.le.s32.totalorder 2, %s15
      // Predicated region
      $region41: #{tpu_custom_call.1} parent=5 // pred_check
        %p450 = pneg %p449
      $region42: #{tpu_custom_call.1} parent=5 // pred_check_branch
        %452 = sbr.rel (%p450) target = $region44
      $region43: #{tpu_custom_call.1} parent=5 // pred_region
        %s453 = ssub.s32 %s15, 2
        // Predicated region
        $region45: #{tpu_custom_call.1} parent=43 // pred_check
          %p454 = pneg %p91
        $region46: #{tpu_custom_call.1} parent=43 // pred_check_branch
          %456 = sbr.rel (%p454) target = $region48
        $region47: #{tpu_custom_call.1} parent=43 // pred_region
          %s457 = sand.u32 %s76, 1
          %s458 = scalar_lea.sflag [#allocation4], %s457
          %s459 = sand.u32 %s76, 1
          %s460 = smul.addr %s459, 80
          %s461 = scalar_lea.vmem [#allocation7], %s460
          %462 = dma.done %s458, 1280
        $region48: #{tpu_custom_call.1} parent=43 // pred_fallthru
          _
      $region44: #{tpu_custom_call.1} parent=5 // pred_fallthru
        _
    $region6: #{tpu_custom_call.1} parent=1 // loop_footer
      %s19 = sadd.s32 1, %s15
    $region7: #{tpu_custom_call.1} parent=1 // loop_footer_branch
      %14 = sbr.rel target = $region3
    $region8: #{tpu_custom_call.1} parent=1 // loop_exit
      _
    %463 = vsyncpa [#allocation3], 1
    %s464 = scalar_lea.sflag [#allocation3], 1
    %465 = vsyncpa %s464, 1
    %466 = vsyncpa [#allocation4], 1
    %s467 = scalar_lea.sflag [#allocation4], 1
    %468 = vsyncpa %s467, 1
    %469 = vsyncpa [#allocation5], 1
    %s470 = scalar_lea.sflag [#allocation5], 1
    %471 = vsyncpa %s470, 1

</llo_original>
